<compile_context>
chip_gen: v5e
topology: v5e:2x2
jax: 0.10.0
libtpu: 0.0.40
codegen_flags: <defaults>
</compile_context>

<pallas_src>
import jax
import jax.numpy as jnp
from jax.experimental import pallas as pl
from jax.experimental.pallas import tpu as pltpu

_LANES = 128


def _choose_tile_d(n, d, itemsize):
    """Generation-aware feature-tile width (multiple of 128 lanes)."""
    try:
        vmem_cap = pltpu.get_tpu_info().vmem_capacity_bytes
    except Exception:
        vmem_cap = 64 * 1024 * 1024  # conservative: v7x per-TC VMEM
    # ~8 MiB of double-buffered input on 128 MiB parts (v5e/v6e), ~4 MiB on v7x.
    budget = min(8 * 1024 * 1024, vmem_cap // 16)
    # 2 inputs x 2 pipeline buffers; size as f32 so the in-kernel upcast
    # temporaries are covered even for bf16 inputs.
    tile = budget // (2 * 2 * max(n, 1) * max(itemsize, 4))
    tile = max(_LANES, min(32768, (tile // _LANES) * _LANES))
    return d if tile >= d else tile


def kl_loss(f_x, f_y, *, tile_d=None):
    """Pallas implementation of KL_Loss.forward. Returns a float32 scalar."""
    assert f_x.shape == f_y.shape
    n = f_x.shape[0]
    # Do NOT upcast here: the kernel reads the native dtype (bf16 stays bf16 in
    # HBM, halving bytes moved) and converts to f32 on-chip.
    x2 = f_x.reshape(n, -1)
    y2 = f_y.reshape(n, -1)
    N, D = x2.shape

    if tile_d is None:
        tile_d = _choose_tile_d(N, D, x2.dtype.itemsize)
    if tile_d >= D:
        tile_d = D                      # single tile spans the full feature dim
    else:
        tile_d = max(_LANES, (tile_d // _LANES) * _LANES)
    num_tiles = pl.cdiv(D, tile_d)
    needs_mask = (D % tile_d) != 0      # last tile has out-of-bounds lanes

    # NOTE: N == 1 gives a 0-sample unbiased variance (nan), matching
    # torch.std's behavior for a single sample.
    inv_nm1 = (1.0 / (N - 1)) if N > 1 else float("inf")
    inv_n = 1.0 / N

    def _kernel(x_ref, y_ref, o_ref):
        x = x_ref[...].astype(jnp.float32)     # (N, TILE_D)
        y = y_ref[...].astype(jnp.float32)
        td = x.shape[1]

        # Batch-axis sums on the (otherwise idle) MXU instead of XLU sublane
        # reductions: (1, N) @ (N, TILE_D).
        ones = jnp.ones((1, N), jnp.float32)
        mu_x = jnp.dot(ones, x, preferred_element_type=jnp.float32) * inv_n
        mu_y = jnp.dot(ones, y, preferred_element_type=jnp.float32) * inv_n
        xc = x - mu_x
        yc = y - mu_y
        # Two-pass (centered) variance keeps full f32 accuracy.
        var_x = jnp.dot(ones, xc * xc, preferred_element_type=jnp.float32) * inv_nm1
        var_y = jnp.dot(ones, yc * yc, preferred_element_type=jnp.float32) * inv_nm1
        std_x = jnp.sqrt(var_x) + 1e-6         # eps on std, like the PyTorch code
        std_y = jnp.sqrt(var_y) + 1e-6

        dmu = mu_x - mu_y
        # log(std_y/std_x) -> log difference (two EUP logs, no f32 divide);
        # exact reciprocal keeps bit-level agreement with the reference
        # (approx=True would add ~1e-4 relative error).
        inv_2vy = 0.5 * pl.reciprocal(std_y * std_y, approx=False)
        kl = (jnp.log(std_y) - jnp.log(std_x)
              + (std_x * std_x + dmu * dmu) * inv_2vy
              - 0.5)                           # (1, TILE_D)

        if needs_mask:
            col = (jax.lax.broadcasted_iota(jnp.int32, (1, td), 1)
                   + pl.program_id(0) * td)
            kl = jnp.where(col < D, kl, 0.0)   # zero out-of-bounds lanes

        partial = jnp.sum(kl)                  # per-tile partial KL sum
        # All 128 lanes carry the same partial -> unmasked, lane-dense store.
        o_ref[...] = jnp.full((1, 1, _LANES), partial, jnp.float32)

    vmem_limit = int(min(max(32 * 1024 * 1024,
                             2 * 2 * N * tile_d * 4 + (8 << 20)),
                         48 * 1024 * 1024))

    # Advisory cost hint: the call is bytes-dominated (streaming 2 inputs once).
    cost = pl.CostEstimate(
        flops=int(10 * N * D),
        transcendentals=int(5 * D),
        bytes_accessed=int(2 * N * D * x2.dtype.itemsize + num_tiles * _LANES * 4),
    )

    partials = pl.pallas_call(
        _kernel,
        out_shape=jax.ShapeDtypeStruct((num_tiles, 1, _LANES), jnp.float32),
        grid=(num_tiles,),
        in_specs=[
            pl.BlockSpec((N, tile_d), lambda i: (0, i)),
            pl.BlockSpec((N, tile_d), lambda i: (0, i)),
        ],
        out_specs=pl.BlockSpec((1, 1, _LANES), lambda i: (i, 0, 0)),
        compiler_params=pltpu.CompilerParams(
            dimension_semantics=("parallel",),
            vmem_limit_bytes=vmem_limit,
        ),
        cost_estimate=cost,
    )(x2, y2)

    # Tiny final reduction over per-tile partials (all 128 lanes of a block
    # hold the same partial; take lane 0).
    return jnp.sum(partials[:, 0, 0]) / D

    # TODO(synk): for very large batch N (where N x TILE_D no longer fits in
    # VMEM), add an N-axis grid with one-pass f32 sum/sumsq accumulation so
    # the whole batch never has to be resident.


if __name__ == "__main__":
    key = jax.random.PRNGKey(0)
    k1, k2, k3, k4 = jax.random.split(key, 4)

    def _ref(fx, fy):
        n = fx.shape[0]
        fx2 = fx.reshape(n, -1).astype(jnp.float32)
        fy2 = fy.reshape(n, -1).astype(jnp.float32)
        mu_x, mu_y = jnp.mean(fx2, 0), jnp.mean(fy2, 0)
        std_x = jnp.std(fx2, 0, ddof=1) + 1e-6
        std_y = jnp.std(fy2, 0, ddof=1) + 1e-6
        kl = (jnp.log(std_y / std_x)
              + (std_x ** 2 + (mu_x - mu_y) ** 2) / (2 * std_y ** 2) - 0.5)
        return kl.mean()

    # Test 1: NCHW-style feature map, flattened to (N, C*H*W) in the wrapper.
    f_x = jax.random.normal(k1, (8, 4, 8, 8), dtype=jnp.float32)
    f_y = 0.5 * jax.random.normal(k2, (8, 4, 8, 8), dtype=jnp.float32) + 0.1
    loss = kl_loss(f_x, f_y)
    jax.block_until_ready(loss)
    ref = _ref(f_x, f_y)
    assert jnp.allclose(loss, ref, rtol=1e-5, atol=1e-5), (loss, ref)

    # Test 2: ragged feature dim with a forced small tile — exercises the
    # D-axis grid / pipelining and the out-of-bounds lane mask on the last tile.
    g_x = jax.random.normal(k3, (16, 200), dtype=jnp.float32)
    g_y = 1.5 * jax.random.normal(k4, (16, 200), dtype=jnp.float32) - 0.2
    loss2 = kl_loss(g_x, g_y, tile_d=128)
    jax.block_until_ready(loss2)
    ref2 = _ref(g_x, g_y)
    assert jnp.allclose(loss2, ref2, rtol=1e-5, atol=1e-5), (loss2, ref2)

    print("KERNEL_OK")
</pallas_src>

<mosaic_0001>
module attributes {stable_mosaic.version = 11 : i64} {
  func.func @_kernel(%arg0: i32, %arg1: memref<8x256xf32, #tpu.memory_space<vmem>>, %arg2: memref<8x256xf32, #tpu.memory_space<vmem>>, %arg3: memref<1x1x128xf32, #tpu.memory_space<vmem>>) attributes {dimension_semantics = [#tpu.dimension_semantics<parallel>], iteration_bounds = array<i64: 1>, scalar_prefetch = 0 : i64, scratch_operands = 0 : i64, tpu.core_type = #tpu.core_type<tc>, window_params = [{transform_indices = @transform_0, window_bounds = array<i64: 8, 256>}, {transform_indices = @transform_1, window_bounds = array<i64: 8, 256>}, {transform_indices = @transform_2, window_bounds = array<i64: 1, 1, 128>}]} {
    %c0 = arith.constant 0 : index
    %c0_0 = arith.constant 0 : index
    %0 = vector.load %arg1[%c0, %c0_0] : memref<8x256xf32, #tpu.memory_space<vmem>>, vector<8x256xf32>
    %c0_1 = arith.constant 0 : index
    %c0_2 = arith.constant 0 : index
    %1 = vector.load %arg2[%c0_1, %c0_2] : memref<8x256xf32, #tpu.memory_space<vmem>>, vector<8x256xf32>
    %cst = arith.constant 1.000000e+00 : f32
    %2 = vector.broadcast %cst : f32 to vector<1x8xf32>
    %cst_3 = arith.constant dense<0.000000e+00> : vector<1x256xf32>
    %3 = tpu.matmul %2, %0, %cst_3 {dimension_numbers = #tpu.dot_dimension_numbers<[1], [0], [0], [1], [0, 0, 1, 1], [], []>} : vector<1x8xf32>, vector<8x256xf32>, vector<1x256xf32> -> vector<1x256xf32>
    %cst_4 = arith.constant 1.250000e-01 : f32
    %4 = vector.broadcast %cst_4 : f32 to vector<1x256xf32>
    %5 = arith.mulf %3, %4 : vector<1x256xf32>
    %cst_5 = arith.constant dense<0.000000e+00> : vector<1x256xf32>
    %6 = tpu.matmul %2, %1, %cst_5 {dimension_numbers = #tpu.dot_dimension_numbers<[1], [0], [0], [1], [0, 0, 1, 1], [], []>} : vector<1x8xf32>, vector<8x256xf32>, vector<1x256xf32> -> vector<1x256xf32>
    %cst_6 = arith.constant 1.250000e-01 : f32
    %7 = vector.broadcast %cst_6 : f32 to vector<1x256xf32>
    %8 = arith.mulf %6, %7 : vector<1x256xf32>
    %9 = vector.broadcast %5 : vector<1x256xf32> to vector<8x256xf32>
    %10 = arith.subf %0, %9 : vector<8x256xf32>
    %11 = vector.broadcast %8 : vector<1x256xf32> to vector<8x256xf32>
    %12 = arith.subf %1, %11 : vector<8x256xf32>
    %13 = arith.mulf %10, %10 : vector<8x256xf32>
    %cst_7 = arith.constant dense<0.000000e+00> : vector<1x256xf32>
    %14 = tpu.matmul %2, %13, %cst_7 {dimension_numbers = #tpu.dot_dimension_numbers<[1], [0], [0], [1], [0, 0, 1, 1], [], []>} : vector<1x8xf32>, vector<8x256xf32>, vector<1x256xf32> -> vector<1x256xf32>
    %cst_8 = arith.constant 0.142857149 : f32
    %15 = vector.broadcast %cst_8 : f32 to vector<1x256xf32>
    %16 = arith.mulf %14, %15 : vector<1x256xf32>
    %17 = arith.mulf %12, %12 : vector<8x256xf32>
    %cst_9 = arith.constant dense<0.000000e+00> : vector<1x256xf32>
    %18 = tpu.matmul %2, %17, %cst_9 {dimension_numbers = #tpu.dot_dimension_numbers<[1], [0], [0], [1], [0, 0, 1, 1], [], []>} : vector<1x8xf32>, vector<8x256xf32>, vector<1x256xf32> -> vector<1x256xf32>
    %cst_10 = arith.constant 0.142857149 : f32
    %19 = vector.broadcast %cst_10 : f32 to vector<1x256xf32>
    %20 = arith.mulf %18, %19 : vector<1x256xf32>
    %21 = math.sqrt %16 : vector<1x256xf32>
    %cst_11 = arith.constant 9.99999997E-7 : f32
    %22 = vector.broadcast %cst_11 : f32 to vector<1x256xf32>
    %23 = arith.addf %21, %22 : vector<1x256xf32>
    %24 = math.sqrt %20 : vector<1x256xf32>
    %cst_12 = arith.constant 9.99999997E-7 : f32
    %25 = vector.broadcast %cst_12 : f32 to vector<1x256xf32>
    %26 = arith.addf %24, %25 : vector<1x256xf32>
    %27 = arith.subf %5, %8 : vector<1x256xf32>
    %28 = arith.mulf %26, %26 : vector<1x256xf32>
    %29 = tpu.reciprocal %28 : vector<1x256xf32> -> vector<1x256xf32>
    %cst_13 = arith.constant 5.000000e-01 : f32
    %30 = vector.broadcast %cst_13 : f32 to vector<1x256xf32>
    %31 = arith.mulf %30, %29 : vector<1x256xf32>
    %32 = math.log %26 : vector<1x256xf32>
    %33 = math.log %23 : vector<1x256xf32>
    %34 = arith.subf %32, %33 : vector<1x256xf32>
    %35 = arith.mulf %23, %23 : vector<1x256xf32>
    %36 = arith.mulf %27, %27 : vector<1x256xf32>
    %37 = arith.addf %35, %36 : vector<1x256xf32>
    %38 = arith.mulf %37, %31 : vector<1x256xf32>
    %39 = arith.addf %34, %38 : vector<1x256xf32>
    %cst_14 = arith.constant 5.000000e-01 : f32
    %40 = vector.broadcast %cst_14 : f32 to vector<1x256xf32>
    %41 = arith.subf %39, %40 : vector<1x256xf32>
    %42 = vector.shape_cast %41 : vector<1x256xf32> to vector<1x1x256xf32>
    %cst_15 = arith.constant dense<0.000000e+00> : vector<1xf32>
    %43 = vector.multi_reduction <add>, %42, %cst_15 [1, 2] : vector<1x1x256xf32> to vector<1xf32>
    %44 = vector.shape_cast %43 : vector<1xf32> to vector<1x1x1xf32>
    %45 = vector.extract %44[0, 0, 0] : f32 from vector<1x1x1xf32>
    %46 = vector.broadcast %45 : f32 to vector<1x1x128xf32>
    %c0_16 = arith.constant 0 : index
    %c0_17 = arith.constant 0 : index
    %c0_18 = arith.constant 0 : index
    %47 = vector.load %arg3[%c0_16, %c0_17, %c0_18] : memref<1x1x128xf32, #tpu.memory_space<vmem>>, vector<1x1x128xf32>
    tpu.vector_store %arg3[%c0_16, %c0_17, %c0_18], %46 {strides = array<i32>} : memref<1x1x128xf32, #tpu.memory_space<vmem>>, vector<1x1x128xf32>,
    return
  }
  func.func @transform_0(%arg0: i32) -> (i32, i32) {
    %c0_i32 = arith.constant 0 : i32
    %c0_i32_0 = arith.constant 0 : i32
    return %c0_i32, %arg0 : i32, i32
  }
  func.func @transform_1(%arg0: i32) -> (i32, i32) {
    %c0_i32 = arith.constant 0 : i32
    %c0_i32_0 = arith.constant 0 : i32
    return %c0_i32, %arg0 : i32, i32
  }
  func.func @transform_2(%arg0: i32) -> (i32, i32, i32) {
    %c0_i32 = arith.constant 0 : i32
    %c0_i32_0 = arith.constant 0 : i32
    %c0_i32_1 = arith.constant 0 : i32
    return %arg0, %c0_i32, %c0_i32_0 : i32, i32, i32
  }
}

</mosaic_0001>

<llo_original>
// kernel: tpu_custom_call.1
$region0: #{tpu_custom_call.1}
  #allocation0 [shape = 'u32[]', space=smem, size = 0x4, offset = 0x4, fixed_abs, tag = 'smem constant byte address 0x4 - core index']
  #allocation1 [shape = 'u32[72,128]{1,0:T(1,128)}', space=vmem, size = 0x9000, scoped, tag = 'internal scratch']
  %s0 = inlined_call_operand.hbm [shape: f32[8,256], index: 0, kind: input, shape index: {}]
  %s1 = inlined_call_operand.hbm [shape: f32[8,256], index: 1, kind: input, shape index: {}]
  %s2 = inlined_call_operand.hbm [shape: f32[1,1,128], index: 2, kind: output, shape index: {}]
  %s3 = sld [smem:[#allocation0]]
  $region26: #{tpu_custom_call.1} parent=0
    _
  %s5 = ssub.s32 1, %s3
  %s6 = scalar_select 0, %s5, %s3
  $region1: #{tpu_custom_call.1} parent=0
    #allocation2 [shape = 'u8[8192]{0}', space=vmem, size = 0x2000, scoped, tag = 'input window, operand 0, single buffered']
    #allocation3 [shape = 's32[1]{0}', space=sflag, size = 0x4, scoped, tag = 'scoped memory for tpu_custom_call.1']
    #allocation4 [shape = 's32[1]{0}', space=sflag, size = 0x4, scoped, tag = 'scoped memory for tpu_custom_call.1']
    #allocation5 [shape = 'u8[8192]{0}', space=vmem, size = 0x2000, scoped, tag = 'input window, operand 1, single buffered']
    #allocation6 [shape = 's32[1]{0}', space=sflag, size = 0x4, scoped, tag = 'scoped memory for tpu_custom_call.1']
    #allocation7 [shape = 'u8[512]{0}', space=vmem, size = 0x400, scoped, tag = 'output window, operand 0, single buffered']
    %7 = vsyncpa [#allocation3], 0
    %8 = vsyncpa [#allocation6], 0
    %9 = vsyncpa [#allocation4], 0
    // Predicated region
    $region2: #{tpu_custom_call.1} parent=1 // pred_check
      _
    $region3: #{tpu_custom_call.1} parent=1 // pred_check_branch
      %11 = sbr.rel (0) target = $region5
    $region4: #{tpu_custom_call.1} parent=1 // pred_region
      %13 = vsyncadd [#allocation3], 0
      %s15 = sshll.u32 %s0, 4
      %s16 = int_to_ptr.hbm [resolvable:$true] %s15
      %s17 = sshll.u32 [#allocation2], 4
      %s18 = int_to_ptr.vmem [resolvable:$true] %s17
      %20 = dma.hbm_to_vmem [thread:$0]  %s16, 256, %s18, [#allocation3]
    $region5: #{tpu_custom_call.1} parent=1 // pred_fallthru
      _
    // Predicated region
    $region6: #{tpu_custom_call.1} parent=1 // pred_check
      _
    $region7: #{tpu_custom_call.1} parent=1 // pred_check_branch
      %22 = sbr.rel (0) target = $region9
    $region8: #{tpu_custom_call.1} parent=1 // pred_region
      %24 = vsyncadd [#allocation6], 0
      %s26 = sshll.u32 %s1, 4
      %s27 = int_to_ptr.hbm [resolvable:$true] %s26
      %s28 = sshll.u32 [#allocation5], 4
      %s29 = int_to_ptr.vmem [resolvable:$true] %s28
      %31 = dma.hbm_to_vmem [thread:$0]  %s27, 256, %s29, [#allocation6]
    $region9: #{tpu_custom_call.1} parent=1 // pred_fallthru
      _
    // Predicated region
    $region10: #{tpu_custom_call.1} parent=1 // pred_check
      _
    $region11: #{tpu_custom_call.1} parent=1 // pred_check_branch
      %33 = sbr.rel (0) target = $region13
    $region12: #{tpu_custom_call.1} parent=1 // pred_region
      %35 = dma.done [#allocation3], 256
    $region13: #{tpu_custom_call.1} parent=1 // pred_fallthru
      _
    // Predicated region
    $region14: #{tpu_custom_call.1} parent=1 // pred_check
      _
    $region15: #{tpu_custom_call.1} parent=1 // pred_check_branch
      %37 = sbr.rel (0) target = $region17
    $region16: #{tpu_custom_call.1} parent=1 // pred_region
      %39 = dma.done [#allocation6], 256
    $region17: #{tpu_custom_call.1} parent=1 // pred_fallthru
      _
    %v40 = vld [vmem:[#allocation2] sm:$0xff]
    %v41 = vld [vmem:[#allocation2 + $0x8] sm:$0xff]
    %v42 = vld [vmem:[#allocation5] sm:$0xff]
    %v43 = vld [vmem:[#allocation5 + $0x8] sm:$0xff]
    %vm44 = vcmask 64512
    %v46 = vsel %vm44, 1.0, 0
    %48 = vmatpush.msra.mxu0 0.0
    %49 = vmatpush.msra.mxu0 0.0
    %50 = vmatpush.msra.mxu0 0.0
    %51 = vmatpush.msra.mxu0 0.0
    %52 = vmatpush.msra.mxu0 0.0
    %53 = vmatpush.msra.mxu0 0.0
    %54 = vmatpush.msra.mxu0 0.0
    %55 = vmatpush.msra.mxu0 0.0
    %56 = vmatpush.msra.mxu0 0.0
    %57 = vmatpush.msra.mxu0 0.0
    %58 = vmatpush.msra.mxu0 0.0
    %59 = vmatpush.msra.mxu0 0.0
    %60 = vmatpush.msra.mxu0 0.0
    %61 = vmatpush.msra.mxu0 0.0
    %62 = vmatpush.msra.mxu0 0.0
    %63 = vmatpush.msra.mxu0 %v40
    %64 = vmatmul.f32.gmra.mxu0 %v46
    %v65 = vpop.f32.mrf.mxu0
    %v66 = vadd.f32 0.0, %v65
    %67 = vdwg.mxu0
    %68 = vmatpush.msra.mxu0 0.0
    %69 = vmatpush.msra.mxu0 0.0
    %70 = vmatpush.msra.mxu0 0.0
    %71 = vmatpush.msra.mxu0 0.0
    %72 = vmatpush.msra.mxu0 0.0
    %73 = vmatpush.msra.mxu0 0.0
    %74 = vmatpush.msra.mxu0 0.0
    %75 = vmatpush.msra.mxu0 0.0
    %76 = vmatpush.msra.mxu0 0.0
    %77 = vmatpush.msra.mxu0 0.0
    %78 = vmatpush.msra.mxu0 0.0
    %79 = vmatpush.msra.mxu0 0.0
    %80 = vmatpush.msra.mxu0 0.0
    %81 = vmatpush.msra.mxu0 0.0
    %82 = vmatpush.msra.mxu0 0.0
    %83 = vmatpush.msra.mxu0 %v41
    %84 = vmatmul.f32.gmra.mxu0 %v46
    %v85 = vpop.f32.mrf.mxu0
    %v86 = vadd.f32 0.0, %v85
    %87 = vdwg.mxu0
    %v88 = vmul.f32 %v66, 0.125
    %v89 = vmul.f32 %v86, 0.125
    %90 = vmatpush.msra.mxu0 0.0
    %91 = vmatpush.msra.mxu0 0.0
    %92 = vmatpush.msra.mxu0 0.0
    %93 = vmatpush.msra.mxu0 0.0
    %94 = vmatpush.msra.mxu0 0.0
    %95 = vmatpush.msra.mxu0 0.0
    %96 = vmatpush.msra.mxu0 0.0
    %97 = vmatpush.msra.mxu0 0.0
    %98 = vmatpush.msra.mxu0 0.0
    %99 = vmatpush.msra.mxu0 0.0
    %100 = vmatpush.msra.mxu0 0.0
    %101 = vmatpush.msra.mxu0 0.0
    %102 = vmatpush.msra.mxu0 0.0
    %103 = vmatpush.msra.mxu0 0.0
    %104 = vmatpush.msra.mxu0 0.0
    %105 = vmatpush.msra.mxu0 %v42
    %106 = vmatmul.f32.gmra.mxu0 %v46
    %v107 = vpop.f32.mrf.mxu0
    %v108 = vadd.f32 0.0, %v107
    %109 = vdwg.mxu0
    %110 = vmatpush.msra.mxu0 0.0
    %111 = vmatpush.msra.mxu0 0.0
    %112 = vmatpush.msra.mxu0 0.0
    %113 = vmatpush.msra.mxu0 0.0
    %114 = vmatpush.msra.mxu0 0.0
    %115 = vmatpush.msra.mxu0 0.0
    %116 = vmatpush.msra.mxu0 0.0
    %117 = vmatpush.msra.mxu0 0.0
    %118 = vmatpush.msra.mxu0 0.0
    %119 = vmatpush.msra.mxu0 0.0
    %120 = vmatpush.msra.mxu0 0.0
    %121 = vmatpush.msra.mxu0 0.0
    %122 = vmatpush.msra.mxu0 0.0
    %123 = vmatpush.msra.mxu0 0.0
    %124 = vmatpush.msra.mxu0 0.0
    %125 = vmatpush.msra.mxu0 %v43
    %126 = vmatmul.f32.gmra.mxu0 %v46
    %v127 = vpop.f32.mrf.mxu0
    %v128 = vadd.f32 0.0, %v127
    %129 = vdwg.mxu0
    %v130 = vmul.f32 %v108, 0.125
    %v131 = vmul.f32 %v128, 0.125
    %v132 = vperm.slane %v88, 0
    %v133 = vperm.slane %v89, 0
    %v134 = vsub.f32 %v40, %v132
    %v135 = vsub.f32 %v41, %v133
    %v136 = vperm.slane %v130, 0
    %v137 = vperm.slane %v131, 0
    %v138 = vsub.f32 %v42, %v136
    %v139 = vsub.f32 %v43, %v137
    %v140 = vmul.f32 %v134, %v134
    %v141 = vmul.f32 %v135, %v135
    %142 = vmatpush.msra.mxu0 0.0
    %143 = vmatpush.msra.mxu0 0.0
    %144 = vmatpush.msra.mxu0 0.0
    %145 = vmatpush.msra.mxu0 0.0
    %146 = vmatpush.msra.mxu0 0.0
    %147 = vmatpush.msra.mxu0 0.0
    %148 = vmatpush.msra.mxu0 0.0
    %149 = vmatpush.msra.mxu0 0.0
    %150 = vmatpush.msra.mxu0 0.0
    %151 = vmatpush.msra.mxu0 0.0
    %152 = vmatpush.msra.mxu0 0.0
    %153 = vmatpush.msra.mxu0 0.0
    %154 = vmatpush.msra.mxu0 0.0
    %155 = vmatpush.msra.mxu0 0.0
    %156 = vmatpush.msra.mxu0 0.0
    %157 = vmatpush.msra.mxu0 %v140
    %158 = vmatmul.f32.gmra.mxu0 %v46
    %v159 = vpop.f32.mrf.mxu0
    %v160 = vadd.f32 0.0, %v159
    %161 = vdwg.mxu0
    %162 = vmatpush.msra.mxu0 0.0
    %163 = vmatpush.msra.mxu0 0.0
    %164 = vmatpush.msra.mxu0 0.0
    %165 = vmatpush.msra.mxu0 0.0
    %166 = vmatpush.msra.mxu0 0.0
    %167 = vmatpush.msra.mxu0 0.0
    %168 = vmatpush.msra.mxu0 0.0
    %169 = vmatpush.msra.mxu0 0.0
    %170 = vmatpush.msra.mxu0 0.0
    %171 = vmatpush.msra.mxu0 0.0
    %172 = vmatpush.msra.mxu0 0.0
    %173 = vmatpush.msra.mxu0 0.0
    %174 = vmatpush.msra.mxu0 0.0
    %175 = vmatpush.msra.mxu0 0.0
    %176 = vmatpush.msra.mxu0 0.0
    %177 = vmatpush.msra.mxu0 %v141
    %178 = vmatmul.f32.gmra.mxu0 %v46
    %v179 = vpop.f32.mrf.mxu0
    %v180 = vadd.f32 0.0, %v179
    %181 = vdwg.mxu0
    %v182 = vmul.f32 %v160, 0.14285715
    %v183 = vmul.f32 %v180, 0.14285715
    %v184 = vmul.f32 %v138, %v138
    %v185 = vmul.f32 %v139, %v139
    %186 = vmatpush.msra.mxu0 0.0
    %187 = vmatpush.msra.mxu0 0.0
    %188 = vmatpush.msra.mxu0 0.0
    %189 = vmatpush.msra.mxu0 0.0
    %190 = vmatpush.msra.mxu0 0.0
    %191 = vmatpush.msra.mxu0 0.0
    %192 = vmatpush.msra.mxu0 0.0
    %193 = vmatpush.msra.mxu0 0.0
    %194 = vmatpush.msra.mxu0 0.0
    %195 = vmatpush.msra.mxu0 0.0
    %196 = vmatpush.msra.mxu0 0.0
    %197 = vmatpush.msra.mxu0 0.0
    %198 = vmatpush.msra.mxu0 0.0
    %199 = vmatpush.msra.mxu0 0.0
    %200 = vmatpush.msra.mxu0 0.0
    %201 = vmatpush.msra.mxu0 %v184
    %202 = vmatmul.f32.gmra.mxu0 %v46
    %v203 = vpop.f32.mrf.mxu0
    %v204 = vadd.f32 0.0, %v203
    %205 = vdwg.mxu0
    %206 = vmatpush.msra.mxu0 0.0
    %207 = vmatpush.msra.mxu0 0.0
    %208 = vmatpush.msra.mxu0 0.0
    %209 = vmatpush.msra.mxu0 0.0
    %210 = vmatpush.msra.mxu0 0.0
    %211 = vmatpush.msra.mxu0 0.0
    %212 = vmatpush.msra.mxu0 0.0
    %213 = vmatpush.msra.mxu0 0.0
    %214 = vmatpush.msra.mxu0 0.0
    %215 = vmatpush.msra.mxu0 0.0
    %216 = vmatpush.msra.mxu0 0.0
    %217 = vmatpush.msra.mxu0 0.0
    %218 = vmatpush.msra.mxu0 0.0
    %219 = vmatpush.msra.mxu0 0.0
    %220 = vmatpush.msra.mxu0 0.0
    %221 = vmatpush.msra.mxu0 %v185
    %222 = vmatmul.f32.gmra.mxu0 %v46
    %v223 = vpop.f32.mrf.mxu0
    %v224 = vadd.f32 0.0, %v223
    %225 = vdwg.mxu0
    %v226 = vmul.f32 %v204, 0.14285715
    %v227 = vmul.f32 %v224, 0.14285715
    %v228 = vrsqrt.pop %v182
    %v229 = vmul.f32 %v228, %v182
    %v230 = vmul.f32 %v229, %v228
    %v231 = vmul.f32 0.5, %v230
    %v232 = vsub.f32 1.5, %v231
    %v233 = vmul.f32 %v228, %v232
    %v234 = vmul.f32 %v182, %v233
    %vm235 = vcmp.eq.f32.partialorder %v182, inf
    %v236 = vsel %vm235, %v182, %v234
    %vm237 = vcmp.eq.f32.partialorder %v182, 0.0
    %v238 = vand.u32 %v182, 2147483648
    %v239 = vsel %vm237, %v238, %v236
    %v240 = vrsqrt.pop %v183
    %v241 = vmul.f32 %v240, %v183
    %v242 = vmul.f32 %v241, %v240
    %v243 = vmul.f32 0.5, %v242
    %v244 = vsub.f32 1.5, %v243
    %v245 = vmul.f32 %v240, %v244
    %v246 = vmul.f32 %v183, %v245
    %vm247 = vcmp.eq.f32.partialorder %v183, inf
    %v248 = vsel %vm247, %v183, %v246
    %vm249 = vcmp.eq.f32.partialorder %v183, 0.0
    %v250 = vand.u32 %v183, 2147483648
    %v251 = vsel %vm249, %v250, %v248
    %v252 = vadd.f32 %v239, 1e-06
    %v253 = vadd.f32 %v251, 1e-06
    %v254 = vrsqrt.pop %v226
    %v255 = vmul.f32 %v254, %v226
    %v256 = vmul.f32 %v255, %v254
    %v257 = vmul.f32 0.5, %v256
    %v258 = vsub.f32 1.5, %v257
    %v259 = vmul.f32 %v254, %v258
    %v260 = vmul.f32 %v226, %v259
    %vm261 = vcmp.eq.f32.partialorder %v226, inf
    %v262 = vsel %vm261, %v226, %v260
    %vm263 = vcmp.eq.f32.partialorder %v226, 0.0
    %v264 = vand.u32 %v226, 2147483648
    %v265 = vsel %vm263, %v264, %v262
    %v266 = vrsqrt.pop %v227
    %v267 = vmul.f32 %v266, %v227
    %v268 = vmul.f32 %v267, %v266
    %v269 = vmul.f32 0.5, %v268
    %v270 = vsub.f32 1.5, %v269
    %v271 = vmul.f32 %v266, %v270
    %v272 = vmul.f32 %v227, %v271
    %vm273 = vcmp.eq.f32.partialorder %v227, inf
    %v274 = vsel %vm273, %v227, %v272
    %vm275 = vcmp.eq.f32.partialorder %v227, 0.0
    %v276 = vand.u32 %v227, 2147483648
    %v277 = vsel %vm275, %v276, %v274
    %v278 = vadd.f32 %v265, 1e-06
    %v279 = vadd.f32 %v277, 1e-06
    %v280 = vsub.f32 %v88, %v130
    %v281 = vsub.f32 %v89, %v131
    %v282 = vmul.f32 %v278, %v278
    %v283 = vmul.f32 %v279, %v279
    %v284 = vrcp.pop %v282
    %v285 = vmul.f32 %v282, %v284
    %v286 = vsub.f32 1.0, %v285
    %v287 = vmul.f32 %v284, %v286
    %v288 = vadd.f32 %v284, %v287
    %vm289 = vweird.f32 %v282
    %vm290 = vweird.f32 %v284
    %vm291 = vmor %vm289, %vm290
    %v292 = vsel %vm291, %v284, %v288
    %v293 = vand.u32 2147483647, %v282
    %vm294 = vcmp.eq.f32.partialorder %v293, 8.507059e+37
    %v295 = vand.u32 %v282, 2147483648
    %v296 = vor.u32 1.1754944e-38, %v295
    %v297 = vsel %vm294, %v296, %v292
    %v298 = vrcp.pop %v283
    %v299 = vmul.f32 %v283, %v298
    %v300 = vsub.f32 1.0, %v299
    %v301 = vmul.f32 %v298, %v300
    %v302 = vadd.f32 %v298, %v301
    %vm303 = vweird.f32 %v283
    %vm304 = vweird.f32 %v298
    %vm305 = vmor %vm303, %vm304
    %v306 = vsel %vm305, %v298, %v302
    %v307 = vand.u32 2147483647, %v283
    %vm308 = vcmp.eq.f32.partialorder %v307, 8.507059e+37
    %v309 = vand.u32 %v283, 2147483648
    %v310 = vor.u32 1.1754944e-38, %v309
    %v311 = vsel %vm308, %v310, %v306
    %v312 = vmul.f32 %v297, 0.5
    %v313 = vmul.f32 %v311, 0.5
    %v314 = vlog2.pop %v278
    %v315 = vmul.f32 %v314, 0.6931472
    %v316 = vlog2.pop %v279
    %v317 = vmul.f32 %v316, 0.6931472
    %v318 = vlog2.pop %v252
    %v319 = vmul.f32 %v318, 0.6931472
    %v320 = vlog2.pop %v253
    %v321 = vmul.f32 %v320, 0.6931472
    %v322 = vsub.f32 %v315, %v319
    %v323 = vsub.f32 %v317, %v321
    %v324 = vmul.f32 %v252, %v252
    %v325 = vmul.f32 %v253, %v253
    %v326 = vmul.f32 %v280, %v280
    %v327 = vmul.f32 %v281, %v281
    %v328 = vadd.f32 %v324, %v326
    %v329 = vadd.f32 %v325, %v327
    %v330 = vmul.f32 %v328, %v312
    %v331 = vmul.f32 %v329, %v313
    %v332 = vadd.f32 %v322, %v330
    %v333 = vadd.f32 %v323, %v331
    %v334 = vsub.f32 %v332, 0.5
    %v335 = vsub.f32 %v333, 0.5
    %vm336 = vcmask 1040384
    %v337 = vsel %vm336, %v334, 0.0
    %v338 = vsel %vm336, %v335, 0.0
    %v339 = vadd.f32 %v337, %v338
    %340 = vadd.xlane.f32.xlu0 %v339
    %v341 = vpop.xlane.xlu0 %340
    %v342 = vrot.slane %v341, 4
    %v343 = vadd.f32 %v341, %v342
    %v344 = vrot.slane %v343, 2
    %v345 = vadd.f32 %v343, %v344
    %v346 = vrot.slane %v345, 1
    %v347 = vadd.f32 %v345, %v346
    %s348 = vtos %v347
    %v349 = vstv %s348
    %350 = vst [vmem:[#allocation7] sm:$0x1] %v349
    // Predicated region
    $region18: #{tpu_custom_call.1} parent=1 // pred_check
      _
    $region19: #{tpu_custom_call.1} parent=1 // pred_check_branch
      %352 = sbr.rel (0) target = $region21
    $region20: #{tpu_custom_call.1} parent=1 // pred_region
      %354 = vsyncadd [#allocation4], 0
      %s356 = sshll.u32 [#allocation7], 4
      %s357 = int_to_ptr.vmem [resolvable:$true] %s356
      %s358 = sshll.u32 %s2, 4
      %s359 = int_to_ptr.hbm [resolvable:$true] %s358
      %361 = dma.vmem_to_hbm [thread:$0]  %s357, 16, %s359, [#allocation4]
    $region21: #{tpu_custom_call.1} parent=1 // pred_fallthru
      _
    // Predicated region
    $region22: #{tpu_custom_call.1} parent=1 // pred_check
      _
    $region23: #{tpu_custom_call.1} parent=1 // pred_check_branch
      %363 = sbr.rel (0) target = $region25
    $region24: #{tpu_custom_call.1} parent=1 // pred_region
      %365 = dma.done [#allocation4], 16
    $region25: #{tpu_custom_call.1} parent=1 // pred_fallthru
      _
    %366 = vsyncpa [#allocation3], 1
    %367 = vsyncpa [#allocation6], 1
    %368 = vsyncpa [#allocation4], 1

</llo_original>
